<compile_context>
chip_gen: v5e
topology: v5e:2x2
jax: 0.10.0
libtpu: 0.0.40
codegen_flags: <defaults>
</compile_context>

<pallas_src>
import functools

import jax
import jax.numpy as jnp
from jax.experimental import pallas as pl
from jax.experimental.pallas import tpu as pltpu

LANE = 128        # TPU lane width
MAX_TILE_B = 1024 # max rows per grid step (VMEM footprint still < 2 MiB double-buffered)


def _round_up(a, m):
    return (a + m - 1) // m * m


def dqn_kernel(x_ref, w1_ref, b1_ref, w2_ref, b2_ref, w3_ref, b3_ref, o_ref):
    # All three matmuls + biases + ReLUs fused on-chip in VMEM.
    # bf16 MXU operands, f32 accumulation and f32 bias adds.
    x = x_ref[...].astype(jnp.bfloat16)  # in-kernel cast (VPU, free) — no wrapper cast op
    h1 = jnp.dot(x, w1_ref[...], preferred_element_type=jnp.float32) + b1_ref[...]
    h1 = jnp.maximum(h1, 0.0).astype(jnp.bfloat16)
    h2 = jnp.dot(h1, w2_ref[...], preferred_element_type=jnp.float32) + b2_ref[...]
    h2 = jnp.maximum(h2, 0.0).astype(jnp.bfloat16)
    # Output slab is lane-dense (padded to a multiple of 128 columns): unmasked stores.
    o_ref[...] = (
        jnp.dot(h2, w3_ref[...], preferred_element_type=jnp.float32) + b3_ref[...]
    )


def prepare_params(params):
    """One-time preparation: pad the output layer to a lane-dense 128-wide slab and
    cast weight matrices to bf16. Call once (e.g. after each optimizer step), NOT
    per forward — removes ~6 XLA pad/cast ops + HBM round trips from every call."""
    w1, b1, w2, b2, w3, b3 = params
    num_action = w3.shape[1]
    n_out = _round_up(num_action, LANE)
    w3p = jnp.pad(w3, ((0, 0), (0, n_out - num_action)))
    b3p = jnp.pad(b3, ((0, 0), (0, n_out - num_action)))
    return (
        w1.astype(jnp.bfloat16), b1.astype(jnp.float32),
        w2.astype(jnp.bfloat16), b2.astype(jnp.float32),
        w3p.astype(jnp.bfloat16), b3p.astype(jnp.float32),
    )


def _choose_tiling(batch):
    """Bucket the padded batch to a power of two (>=16) to avoid per-batch-size
    recompiles; pick a tile that gives >=2 grid steps once the batch is big enough
    (both v7x TensorCores) while keeping tiles large (per-step overhead ~0.35 us)."""
    b_pad = max(16, pl.next_power_of_2(batch))
    if b_pad >= 2 * MAX_TILE_B:
        tile_b = MAX_TILE_B      # huge batches: cap the tile, grid >= 2
    elif b_pad >= 64:
        tile_b = b_pad // 2      # split in two -> both TCs busy on v7x
    else:
        tile_b = b_pad           # tiny rollout batches: single step
    return b_pad, tile_b


@functools.partial(jax.jit, static_argnames=("num_action",))
def _dqn_forward_impl(x, w1b, b1, w2b, b2, w3b, b3p, *, num_action):
    batch, num_state = x.shape
    hidden = w1b.shape[1]
    n_out = w3b.shape[1]

    b_pad, tile_b = _choose_tiling(batch)
    if b_pad != batch:
        x = jnp.pad(x, ((0, b_pad - batch), (0, 0)))

    grid = (b_pad // tile_b,)

    out = pl.pallas_call(
        dqn_kernel,
        out_shape=jax.ShapeDtypeStruct((b_pad, n_out), jnp.float32),
        grid=grid,
        in_specs=[
            # x: tiled along the batch axis (f32 in, cast in-kernel).
            pl.BlockSpec((tile_b, num_state), lambda i: (i, 0)),
            # Weights / biases: constant block index -> VMEM-resident across grid steps.
            pl.BlockSpec((num_state, hidden), lambda i: (0, 0)),
            pl.BlockSpec((1, hidden), lambda i: (0, 0)),
            pl.BlockSpec((hidden, hidden), lambda i: (0, 0)),
            pl.BlockSpec((1, hidden), lambda i: (0, 0)),
            pl.BlockSpec((hidden, n_out), lambda i: (0, 0)),
            pl.BlockSpec((1, n_out), lambda i: (0, 0)),
        ],
        out_specs=pl.BlockSpec((tile_b, n_out), lambda i: (i, 0)),
        compiler_params=pltpu.CompilerParams(
            dimension_semantics=("parallel",),  # batch axis -> both TCs on v7x
        ),
    )(x, w1b, b1, w2b, b2, w3b, b3p)

    # Slice away batch padding and the lane-padded output columns.
    # TODO(synk): for pure action selection, fuse the argmax over actions into the
    # kernel so only (batch,) indices leave VMEM (cuts output HBM traffic 128x).
    return out[:batch, :num_action]


def dqn_forward(x, prepared_params, num_action):
    """Forward pass. x: (batch, num_state) f32; prepared_params from prepare_params()."""
    return _dqn_forward_impl(x, *prepared_params, num_action=num_action)


def init_params(key, num_state, num_action, hidden=128):
    # Deterministic synthetic init (same shapes as the PyTorch layers; weights stored
    # as (in, out), i.e. the transpose of nn.Linear.weight).
    k1, k2, k3, k4, k5, k6 = jax.random.split(key, 6)
    w1 = jax.random.normal(k1, (num_state, hidden), jnp.float32) * 0.1
    b1 = jax.random.normal(k2, (1, hidden), jnp.float32) * 0.1
    w2 = jax.random.normal(k3, (hidden, hidden), jnp.float32) * 0.1
    b2 = jax.random.normal(k4, (1, hidden), jnp.float32) * 0.1
    w3 = jax.random.normal(k5, (hidden, num_action), jnp.float32) * 0.1
    b3 = jax.random.normal(k6, (1, num_action), jnp.float32) * 0.1
    return (w1, b1, w2, b2, w3, b3)


def _ref_forward_f32(x, params):
    w1, b1, w2, b2, w3, b3 = params
    h1 = jnp.maximum(x @ w1 + b1, 0.0)
    h2 = jnp.maximum(h1 @ w2 + b2, 0.0)
    return h2 @ w3 + b3


def _ref_forward_bf16(x, params):
    # Same math as the kernel: bf16 operands, f32 accumulation + bias.
    w1, b1, w2, b2, w3, b3 = params
    xb = x.astype(jnp.bfloat16)
    h1 = jnp.dot(xb, w1.astype(jnp.bfloat16), preferred_element_type=jnp.float32) + b1
    h1 = jnp.maximum(h1, 0.0).astype(jnp.bfloat16)
    h2 = jnp.dot(h1, w2.astype(jnp.bfloat16), preferred_element_type=jnp.float32) + b2
    h2 = jnp.maximum(h2, 0.0).astype(jnp.bfloat16)
    return jnp.dot(h2, w3.astype(jnp.bfloat16), preferred_element_type=jnp.float32) + b3


if __name__ == "__main__":
    num_state = 16
    num_action = 8

    key = jax.random.PRNGKey(0)
    kx1, kx2, kp = jax.random.split(key, 3)
    params = init_params(kp, num_state, num_action)
    prepared = prepare_params(params)  # one-time pad + bf16 cast

    # --- small rollout-sized batch (single tile, single grid step) ---
    x_small = jax.random.normal(kx1, (8, num_state), jnp.float32)
    out_small = jax.block_until_ready(dqn_forward(x_small, prepared, num_action))
    assert out_small.shape == (8, num_action)
    assert jnp.allclose(out_small, _ref_forward_bf16(x_small, params), atol=1e-2, rtol=1e-2)
    assert jnp.allclose(out_small, _ref_forward_f32(x_small, params), atol=5e-2, rtol=5e-2)

    # --- larger training-sized minibatch, non-power-of-two (exercises bucketing,
    #     batch padding, and a 2-step "parallel" grid) ---
    x_big = jax.random.normal(kx2, (300, num_state), jnp.float32)
    out_big = jax.block_until_ready(dqn_forward(x_big, prepared, num_action))
    assert out_big.shape == (300, num_action)
    assert jnp.allclose(out_big, _ref_forward_bf16(x_big, params), atol=1e-2, rtol=1e-2)
    assert jnp.allclose(out_big, _ref_forward_f32(x_big, params), atol=5e-2, rtol=5e-2)

    print("KERNEL_OK")
</pallas_src>

<mosaic_0001>
module attributes {stable_mosaic.version = 11 : i64} {
  func.func @dqn_kernel(%arg0: i32, %arg1: memref<16x16xf32, #tpu.memory_space<vmem>>, %arg2: memref<16x128xbf16, #tpu.memory_space<vmem>>, %arg3: memref<1x128xf32, #tpu.memory_space<vmem>>, %arg4: memref<128x128xbf16, #tpu.memory_space<vmem>>, %arg5: memref<1x128xf32, #tpu.memory_space<vmem>>, %arg6: memref<128x128xbf16, #tpu.memory_space<vmem>>, %arg7: memref<1x128xf32, #tpu.memory_space<vmem>>, %arg8: memref<16x128xf32, #tpu.memory_space<vmem>>) attributes {dimension_semantics = [#tpu.dimension_semantics<parallel>], iteration_bounds = array<i64: 1>, scalar_prefetch = 0 : i64, scratch_operands = 0 : i64, tpu.core_type = #tpu.core_type<tc>, window_params = [{transform_indices = @transform_0, window_bounds = array<i64: 16, 16>}, {pipeline_mode = #tpu.pipeline_mode<synchronous>, transform_indices = @transform_1, window_bounds = array<i64: 16, 128>}, {pipeline_mode = #tpu.pipeline_mode<synchronous>, transform_indices = @transform_2, window_bounds = array<i64: 1, 128>}, {pipeline_mode = #tpu.pipeline_mode<synchronous>, transform_indices = @transform_3, window_bounds = array<i64: 128, 128>}, {pipeline_mode = #tpu.pipeline_mode<synchronous>, transform_indices = @transform_4, window_bounds = array<i64: 1, 128>}, {pipeline_mode = #tpu.pipeline_mode<synchronous>, transform_indices = @transform_5, window_bounds = array<i64: 128, 128>}, {pipeline_mode = #tpu.pipeline_mode<synchronous>, transform_indices = @transform_6, window_bounds = array<i64: 1, 128>}, {transform_indices = @transform_7, window_bounds = array<i64: 16, 128>}]} {
    %c0 = arith.constant 0 : index
    %c0_0 = arith.constant 0 : index
    %0 = vector.load %arg1[%c0, %c0_0] : memref<16x16xf32, #tpu.memory_space<vmem>>, vector<16x16xf32>
    %1 = arith.truncf %0 : vector<16x16xf32> to vector<16x16xbf16>
    %c0_1 = arith.constant 0 : index
    %c0_2 = arith.constant 0 : index
    %2 = vector.load %arg2[%c0_1, %c0_2] : memref<16x128xbf16, #tpu.memory_space<vmem>>, vector<16x128xbf16>
    %cst = arith.constant dense<0.000000e+00> : vector<16x128xf32>
    %3 = tpu.matmul %1, %2, %cst {dimension_numbers = #tpu.dot_dimension_numbers<[1], [0], [0], [1], [0, 0, 1, 1], [], []>} : vector<16x16xbf16>, vector<16x128xbf16>, vector<16x128xf32> -> vector<16x128xf32>
    %c0_3 = arith.constant 0 : index
    %c0_4 = arith.constant 0 : index
    %4 = vector.load %arg3[%c0_3, %c0_4] : memref<1x128xf32, #tpu.memory_space<vmem>>, vector<1x128xf32>
    %5 = vector.broadcast %4 : vector<1x128xf32> to vector<16x128xf32>
    %6 = arith.addf %3, %5 : vector<16x128xf32>
    %cst_5 = arith.constant 0.000000e+00 : f32
    %7 = vector.broadcast %cst_5 : f32 to vector<16x128xf32>
    %8 = arith.maximumf %6, %7 : vector<16x128xf32>
    %9 = arith.truncf %8 : vector<16x128xf32> to vector<16x128xbf16>
    %c0_6 = arith.constant 0 : index
    %c0_7 = arith.constant 0 : index
    %10 = vector.load %arg4[%c0_6, %c0_7] : memref<128x128xbf16, #tpu.memory_space<vmem>>, vector<128x128xbf16>
    %cst_8 = arith.constant dense<0.000000e+00> : vector<16x128xf32>
    %11 = tpu.matmul %9, %10, %cst_8 {dimension_numbers = #tpu.dot_dimension_numbers<[1], [0], [0], [1], [0, 0, 1, 1], [], []>} : vector<16x128xbf16>, vector<128x128xbf16>, vector<16x128xf32> -> vector<16x128xf32>
    %c0_9 = arith.constant 0 : index
    %c0_10 = arith.constant 0 : index
    %12 = vector.load %arg5[%c0_9, %c0_10] : memref<1x128xf32, #tpu.memory_space<vmem>>, vector<1x128xf32>
    %13 = vector.broadcast %12 : vector<1x128xf32> to vector<16x128xf32>
    %14 = arith.addf %11, %13 : vector<16x128xf32>
    %cst_11 = arith.constant 0.000000e+00 : f32
    %15 = vector.broadcast %cst_11 : f32 to vector<16x128xf32>
    %16 = arith.maximumf %14, %15 : vector<16x128xf32>
    %17 = arith.truncf %16 : vector<16x128xf32> to vector<16x128xbf16>
    %c0_12 = arith.constant 0 : index
    %c0_13 = arith.constant 0 : index
    %18 = vector.load %arg6[%c0_12, %c0_13] : memref<128x128xbf16, #tpu.memory_space<vmem>>, vector<128x128xbf16>
    %cst_14 = arith.constant dense<0.000000e+00> : vector<16x128xf32>
    %19 = tpu.matmul %17, %18, %cst_14 {dimension_numbers = #tpu.dot_dimension_numbers<[1], [0], [0], [1], [0, 0, 1, 1], [], []>} : vector<16x128xbf16>, vector<128x128xbf16>, vector<16x128xf32> -> vector<16x128xf32>
    %c0_15 = arith.constant 0 : index
    %c0_16 = arith.constant 0 : index
    %20 = vector.load %arg7[%c0_15, %c0_16] : memref<1x128xf32, #tpu.memory_space<vmem>>, vector<1x128xf32>
    %21 = vector.broadcast %20 : vector<1x128xf32> to vector<16x128xf32>
    %22 = arith.addf %19, %21 : vector<16x128xf32>
    %c0_17 = arith.constant 0 : index
    %c0_18 = arith.constant 0 : index
    %23 = vector.load %arg8[%c0_17, %c0_18] : memref<16x128xf32, #tpu.memory_space<vmem>>, vector<16x128xf32>
    tpu.vector_store %arg8[%c0_17, %c0_18], %22 {strides = array<i32>} : memref<16x128xf32, #tpu.memory_space<vmem>>, vector<16x128xf32>,
    return
  }
  func.func @transform_0(%arg0: i32) -> (i32, i32) {
    %c0_i32 = arith.constant 0 : i32
    %c0_i32_0 = arith.constant 0 : i32
    return %arg0, %c0_i32 : i32, i32
  }
  func.func @transform_1(%arg0: i32) -> (i32, i32) {
    %c0_i32 = arith.constant 0 : i32
    %c0_i32_0 = arith.constant 0 : i32
    %c0_i32_1 = arith.constant 0 : i32
    return %c0_i32, %c0_i32_0 : i32, i32
  }
  func.func @transform_2(%arg0: i32) -> (i32, i32) {
    %c0_i32 = arith.constant 0 : i32
    %c0_i32_0 = arith.constant 0 : i32
    %c0_i32_1 = arith.constant 0 : i32
    return %c0_i32, %c0_i32_0 : i32, i32
  }
  func.func @transform_3(%arg0: i32) -> (i32, i32) {
    %c0_i32 = arith.constant 0 : i32
    %c0_i32_0 = arith.constant 0 : i32
    %c0_i32_1 = arith.constant 0 : i32
    return %c0_i32, %c0_i32_0 : i32, i32
  }
  func.func @transform_4(%arg0: i32) -> (i32, i32) {
    %c0_i32 = arith.constant 0 : i32
    %c0_i32_0 = arith.constant 0 : i32
    %c0_i32_1 = arith.constant 0 : i32
    return %c0_i32, %c0_i32_0 : i32, i32
  }
  func.func @transform_5(%arg0: i32) -> (i32, i32) {
    %c0_i32 = arith.constant 0 : i32
    %c0_i32_0 = arith.constant 0 : i32
    %c0_i32_1 = arith.constant 0 : i32
    return %c0_i32, %c0_i32_0 : i32, i32
  }
  func.func @transform_6(%arg0: i32) -> (i32, i32) {
    %c0_i32 = arith.constant 0 : i32
    %c0_i32_0 = arith.constant 0 : i32
    %c0_i32_1 = arith.constant 0 : i32
    return %c0_i32, %c0_i32_0 : i32, i32
  }
  func.func @transform_7(%arg0: i32) -> (i32, i32) {
    %c0_i32 = arith.constant 0 : i32
    %c0_i32_0 = arith.constant 0 : i32
    return %arg0, %c0_i32 : i32, i32
  }
}

</mosaic_0001>

<llo_original>
// kernel: _dqn_forward_impl.1
$region0: #{_dqn_forward_impl.1}
  #allocation0 [shape = 'u32[]', space=smem, size = 0x4, offset = 0x4, fixed_abs, tag = 'smem constant byte address 0x4 - core index']
  #allocation1 [shape = 'u32[72,128]{1,0:T(1,128)}', space=vmem, size = 0x9000, scoped, tag = 'internal scratch']
  %s0 = inlined_call_operand.vmem [shape: f32[16,16], index: 0, kind: input, shape index: {}]
  %s1 = inlined_call_operand.vmem [shape: bf16[16,128], index: 1, kind: input, shape index: {}]
  %s2 = inlined_call_operand.vmem [shape: f32[1,128], index: 2, kind: input, shape index: {}]
  %s3 = inlined_call_operand.hbm [shape: bf16[128,128], index: 3, kind: input, shape index: {}]
  %s4 = inlined_call_operand.vmem [shape: f32[1,128], index: 4, kind: input, shape index: {}]
  %s5 = inlined_call_operand.hbm [shape: bf16[128,128], index: 5, kind: input, shape index: {}]
  %s6 = inlined_call_operand.vmem [shape: f32[1,128], index: 6, kind: input, shape index: {}]
  %s7 = inlined_call_operand.vmem [shape: f32[16,128], index: 7, kind: output, shape index: {}]
  %s8 = sld [smem:[#allocation0]]
  $region46: #{_dqn_forward_impl.1} parent=0
    _
  %s10 = ssub.s32 1, %s8
  %s11 = scalar_select 0, %s10, %s8
  $region1: #{_dqn_forward_impl.1} parent=0
    #allocation2 [shape = 'u8[32768]{0}', space=vmem, size = 0x8000, scoped, tag = 'input window, operand 3, single buffered']
    #allocation3 [shape = 's32[1]{0}', space=sflag, size = 0x4, scoped, tag = 'scoped memory for _dqn_forward_impl.1']
    #allocation4 [shape = 'u8[32768]{0}', space=vmem, size = 0x8000, scoped, tag = 'input window, operand 5, single buffered']
    #allocation5 [shape = 's32[1]{0}', space=sflag, size = 0x4, scoped, tag = 'scoped memory for _dqn_forward_impl.1']
    %12 = vsyncpa [#allocation3], 0
    %13 = vsyncpa [#allocation5], 0
    // Predicated region
    $region2: #{_dqn_forward_impl.1} parent=1 // pred_check
      _
    $region3: #{_dqn_forward_impl.1} parent=1 // pred_check_branch
      %15 = sbr.rel (0) target = $region5
    $region4: #{_dqn_forward_impl.1} parent=1 // pred_region
      _
    $region5: #{_dqn_forward_impl.1} parent=1 // pred_fallthru
      _
    // Predicated region
    $region6: #{_dqn_forward_impl.1} parent=1 // pred_check
      _
    $region7: #{_dqn_forward_impl.1} parent=1 // pred_check_branch
      %17 = sbr.rel (0) target = $region9
    $region8: #{_dqn_forward_impl.1} parent=1 // pred_region
      _
    $region9: #{_dqn_forward_impl.1} parent=1 // pred_fallthru
      _
    // Predicated region
    $region10: #{_dqn_forward_impl.1} parent=1 // pred_check
      _
    $region11: #{_dqn_forward_impl.1} parent=1 // pred_check_branch
      %19 = sbr.rel (0) target = $region13
    $region12: #{_dqn_forward_impl.1} parent=1 // pred_region
      _
    $region13: #{_dqn_forward_impl.1} parent=1 // pred_fallthru
      _
    // Predicated region
    $region14: #{_dqn_forward_impl.1} parent=1 // pred_check
      _
    $region15: #{_dqn_forward_impl.1} parent=1 // pred_check_branch
      %21 = sbr.rel (0) target = $region17
    $region16: #{_dqn_forward_impl.1} parent=1 // pred_region
      %23 = vsyncadd [#allocation3], 0
      %s24 = sshll.u32 %s3, 4
      %s25 = int_to_ptr.hbm [resolvable:$true] %s24
      %s26 = sshll.u32 [#allocation2], 4
      %s27 = int_to_ptr.vmem [resolvable:$true] %s26
      %32 = dma.hbm_to_vmem [thread:$0]  %s25, 1024, %s27, [#allocation3], 64, 64, 4
    $region17: #{_dqn_forward_impl.1} parent=1 // pred_fallthru
      _
    // Predicated region
    $region18: #{_dqn_forward_impl.1} parent=1 // pred_check
      _
    $region19: #{_dqn_forward_impl.1} parent=1 // pred_check_branch
      %34 = sbr.rel (0) target = $region21
    $region20: #{_dqn_forward_impl.1} parent=1 // pred_region
      _
    $region21: #{_dqn_forward_impl.1} parent=1 // pred_fallthru
      _
    // Predicated region
    $region22: #{_dqn_forward_impl.1} parent=1 // pred_check
      _
    $region23: #{_dqn_forward_impl.1} parent=1 // pred_check_branch
      %36 = sbr.rel (0) target = $region25
    $region24: #{_dqn_forward_impl.1} parent=1 // pred_region
      %38 = vsyncadd [#allocation5], 0
      %s39 = sshll.u32 %s5, 4
      %s40 = int_to_ptr.hbm [resolvable:$true] %s39
      %s41 = sshll.u32 [#allocation4], 4
      %s42 = int_to_ptr.vmem [resolvable:$true] %s41
      %47 = dma.hbm_to_vmem [thread:$0]  %s40, 1024, %s42, [#allocation5], 64, 64, 4
    $region25: #{_dqn_forward_impl.1} parent=1 // pred_fallthru
      _
    // Predicated region
    $region26: #{_dqn_forward_impl.1} parent=1 // pred_check
      _
    $region27: #{_dqn_forward_impl.1} parent=1 // pred_check_branch
      %49 = sbr.rel (0) target = $region29
    $region28: #{_dqn_forward_impl.1} parent=1 // pred_region
      _
    $region29: #{_dqn_forward_impl.1} parent=1 // pred_fallthru
      _
    // Predicated region
    $region30: #{_dqn_forward_impl.1} parent=1 // pred_check
      _
    $region31: #{_dqn_forward_impl.1} parent=1 // pred_check_branch
      %51 = sbr.rel (0) target = $region33
    $region32: #{_dqn_forward_impl.1} parent=1 // pred_region
      %53 = dma.done [#allocation3], 1024
    $region33: #{_dqn_forward_impl.1} parent=1 // pred_fallthru
      _
    // Predicated region
    $region34: #{_dqn_forward_impl.1} parent=1 // pred_check
      _
    $region35: #{_dqn_forward_impl.1} parent=1 // pred_check_branch
      %55 = sbr.rel (0) target = $region37
    $region36: #{_dqn_forward_impl.1} parent=1 // pred_region
      %57 = dma.done [#allocation5], 1024
    $region37: #{_dqn_forward_impl.1} parent=1 // pred_fallthru
      _
    %v59 = vld [vmem:[%s0] sm:$0xff]
    %v60 = vld [vmem:[%s0 + $0x8] sm:$0xff]
    %v61 = vpack.c.bf16 %v60, %v59
    %v62 = vld [vmem:[%s1] sm:$0xf]
    %v63 = vld [vmem:[%s1 + $0x4] sm:$0xf]
    %v64 = vld [vmem:[%s2] sm:$0x1]
    %v66 = vperm.slane %v64, 0
    %v70 = vunpack.c.l.b16 %v62
    %v71 = vunpack.c.l.b16 %v63
    %v72 = vpack.c.b16 %v71, %v70
    %vm74 = vcmask 130048
    %v76 = vsel %vm74, %v61, 0
    %78 = vmatpush.bf16.msra.mxu0 0
    %79 = vmatpush.bf16.msra.mxu0 0
    %80 = vmatpush.bf16.msra.mxu0 0
    %81 = vmatpush.bf16.msra.mxu0 0
    %82 = vmatpush.bf16.msra.mxu0 0
    %83 = vmatpush.bf16.msra.mxu0 0
    %84 = vmatpush.bf16.msra.mxu0 0
    %85 = vmatpush.bf16.msra.mxu0 %v72
    %86 = vmatmul.bf16.gmra.mxu0 %v76
    %v87 = vpop.f32.mrf.mxu0
    %v88 = vadd.f32 %v66, %v87
    %v89 = vpop.f32.mrf.mxu0
    %v90 = vadd.f32 %v66, %v89
    %91 = vdwg.mxu0
    %v92 = vmax.f32 %v88, 0.0
    %v93 = vmax.f32 %v90, 0.0
    %v94 = vpack.c.bf16 %v93, %v92
    %v95 = vld [vmem:[#allocation2] sm:$0xf]
    %v96 = vld [vmem:[#allocation2 + $0x4] sm:$0xf]
    %v97 = vld [vmem:[#allocation2 + $0x8] sm:$0xf]
    %v98 = vld [vmem:[#allocation2 + $0xc] sm:$0xf]
    %v99 = vld [vmem:[#allocation2 + $0x10] sm:$0xf]
    %v100 = vld [vmem:[#allocation2 + $0x14] sm:$0xf]
    %v101 = vld [vmem:[#allocation2 + $0x18] sm:$0xf]
    %v102 = vld [vmem:[#allocation2 + $0x1c] sm:$0xf]
    %v103 = vld [vmem:[#allocation2 + $0x20] sm:$0xf]
    %v104 = vld [vmem:[#allocation2 + $0x24] sm:$0xf]
    %v105 = vld [vmem:[#allocation2 + $0x28] sm:$0xf]
    %v106 = vld [vmem:[#allocation2 + $0x2c] sm:$0xf]
    %v107 = vld [vmem:[#allocation2 + $0x30] sm:$0xf]
    %v108 = vld [vmem:[#allocation2 + $0x34] sm:$0xf]
    %v109 = vld [vmem:[#allocation2 + $0x38] sm:$0xf]
    %v110 = vld [vmem:[#allocation2 + $0x3c] sm:$0xf]
    %v111 = vld [vmem:[%s4] sm:$0x1]
    %v113 = vperm.slane %v111, 0
    %v131 = vunpack.c.l.b16 %v95
    %v132 = vunpack.c.l.b16 %v96
    %v133 = vunpack.c.l.b16 %v97
    %v134 = vunpack.c.l.b16 %v98
    %v135 = vunpack.c.l.b16 %v99
    %v136 = vunpack.c.l.b16 %v100
    %v137 = vunpack.c.l.b16 %v101
    %v138 = vunpack.c.l.b16 %v102
    %v139 = vunpack.c.l.b16 %v103
    %v140 = vunpack.c.l.b16 %v104
    %v141 = vunpack.c.l.b16 %v105
    %v142 = vunpack.c.l.b16 %v106
    %v143 = vunpack.c.l.b16 %v107
    %v144 = vunpack.c.l.b16 %v108
    %v145 = vunpack.c.l.b16 %v109
    %v146 = vunpack.c.l.b16 %v110
    %v147 = vpack.c.b16 %v132, %v131
    %v148 = vpack.c.b16 %v134, %v133
    %v149 = vpack.c.b16 %v136, %v135
    %v150 = vpack.c.b16 %v138, %v137
    %v151 = vpack.c.b16 %v140, %v139
    %v152 = vpack.c.b16 %v142, %v141
    %v153 = vpack.c.b16 %v144, %v143
    %v154 = vpack.c.b16 %v146, %v145
    %163 = vmatpush.bf16.msra.mxu0 %v154
    %164 = vmatpush.bf16.msra.mxu0 %v153
    %165 = vmatpush.bf16.msra.mxu0 %v152
    %166 = vmatpush.bf16.msra.mxu0 %v151
    %167 = vmatpush.bf16.msra.mxu0 %v150
    %168 = vmatpush.bf16.msra.mxu0 %v149
    %169 = vmatpush.bf16.msra.mxu0 %v148
    %170 = vmatpush.bf16.msra.mxu0 %v147
    %171 = vmatmul.bf16.gmra.mxu0 %v94
    %v172 = vpop.f32.mrf.mxu0
    %v173 = vadd.f32 %v113, %v172
    %v174 = vpop.f32.mrf.mxu0
    %v175 = vadd.f32 %v113, %v174
    %176 = vdwg.mxu0
    %v177 = vmax.f32 %v173, 0.0
    %v178 = vmax.f32 %v175, 0.0
    %v179 = vpack.c.bf16 %v178, %v177
    %v180 = vld [vmem:[#allocation4] sm:$0xf]
    %v181 = vld [vmem:[#allocation4 + $0x4] sm:$0xf]
    %v182 = vld [vmem:[#allocation4 + $0x8] sm:$0xf]
    %v183 = vld [vmem:[#allocation4 + $0xc] sm:$0xf]
    %v184 = vld [vmem:[#allocation4 + $0x10] sm:$0xf]
    %v185 = vld [vmem:[#allocation4 + $0x14] sm:$0xf]
    %v186 = vld [vmem:[#allocation4 + $0x18] sm:$0xf]
    %v187 = vld [vmem:[#allocation4 + $0x1c] sm:$0xf]
    %v188 = vld [vmem:[#allocation4 + $0x20] sm:$0xf]
    %v189 = vld [vmem:[#allocation4 + $0x24] sm:$0xf]
    %v190 = vld [vmem:[#allocation4 + $0x28] sm:$0xf]
    %v191 = vld [vmem:[#allocation4 + $0x2c] sm:$0xf]
    %v192 = vld [vmem:[#allocation4 + $0x30] sm:$0xf]
    %v193 = vld [vmem:[#allocation4 + $0x34] sm:$0xf]
    %v194 = vld [vmem:[#allocation4 + $0x38] sm:$0xf]
    %v195 = vld [vmem:[#allocation4 + $0x3c] sm:$0xf]
    %v196 = vld [vmem:[%s6] sm:$0x1]
    %v198 = vperm.slane %v196, 0
    %v216 = vunpack.c.l.b16 %v180
    %v217 = vunpack.c.l.b16 %v181
    %v218 = vunpack.c.l.b16 %v182
    %v219 = vunpack.c.l.b16 %v183
    %v220 = vunpack.c.l.b16 %v184
    %v221 = vunpack.c.l.b16 %v185
    %v222 = vunpack.c.l.b16 %v186
    %v223 = vunpack.c.l.b16 %v187
    %v224 = vunpack.c.l.b16 %v188
    %v225 = vunpack.c.l.b16 %v189
    %v226 = vunpack.c.l.b16 %v190
    %v227 = vunpack.c.l.b16 %v191
    %v228 = vunpack.c.l.b16 %v192
    %v229 = vunpack.c.l.b16 %v193
    %v230 = vunpack.c.l.b16 %v194
    %v231 = vunpack.c.l.b16 %v195
    %v232 = vpack.c.b16 %v217, %v216
    %v233 = vpack.c.b16 %v219, %v218
    %v234 = vpack.c.b16 %v221, %v220
    %v235 = vpack.c.b16 %v223, %v222
    %v236 = vpack.c.b16 %v225, %v224
    %v237 = vpack.c.b16 %v227, %v226
    %v238 = vpack.c.b16 %v229, %v228
    %v239 = vpack.c.b16 %v231, %v230
    %248 = vmatpush.bf16.msra.mxu0 %v239
    %249 = vmatpush.bf16.msra.mxu0 %v238
    %250 = vmatpush.bf16.msra.mxu0 %v237
    %251 = vmatpush.bf16.msra.mxu0 %v236
    %252 = vmatpush.bf16.msra.mxu0 %v235
    %253 = vmatpush.bf16.msra.mxu0 %v234
    %254 = vmatpush.bf16.msra.mxu0 %v233
    %255 = vmatpush.bf16.msra.mxu0 %v232
    %256 = vmatmul.bf16.gmra.mxu0 %v179
    %v257 = vpop.f32.mrf.mxu0
    %v258 = vadd.f32 %v198, %v257
    %v259 = vpop.f32.mrf.mxu0
    %v260 = vadd.f32 %v198, %v259
    %261 = vdwg.mxu0
    %262 = vst [vmem:[%s7] sm:$0xff] %v258
    %263 = vst [vmem:[%s7 + $0x8] sm:$0xff] %v260
    // Predicated region
    $region38: #{_dqn_forward_impl.1} parent=1 // pred_check
      _
    $region39: #{_dqn_forward_impl.1} parent=1 // pred_check_branch
      %265 = sbr.rel (0) target = $region41
    $region40: #{_dqn_forward_impl.1} parent=1 // pred_region
      _
    $region41: #{_dqn_forward_impl.1} parent=1 // pred_fallthru
      _
    // Predicated region
    $region42: #{_dqn_forward_impl.1} parent=1 // pred_check
      _
    $region43: #{_dqn_forward_impl.1} parent=1 // pred_check_branch
      %267 = sbr.rel (0) target = $region45
    $region44: #{_dqn_forward_impl.1} parent=1 // pred_region
      _
    $region45: #{_dqn_forward_impl.1} parent=1 // pred_fallthru
      _
    %268 = vsyncpa [#allocation3], 1
    %269 = vsyncpa [#allocation5], 1

</llo_original>
